<compile_context>
chip_gen: v6e
topology: v6e:2x2x1
jax: 0.10.0
libtpu: 0.0.40
codegen_flags: <defaults>
</compile_context>

<pallas_src>
import jax
import jax.numpy as jnp
from jax.experimental import pallas as pl
from jax.experimental.pallas import tpu as pltpu

ALPHA = 0.1   # SReLU alpha
BETA = 0.8    # SReLU beta
EPS = 1e-5    # BatchNorm eps
LANE = 128    # TPU lane width


def _round_up(x, m):
    return (x + m - 1) // m * m


def conv_bn_srelu_kernel(p_ref, w_ref, scale_ref, bias_ref, o_ref):
    """One GEMM tile + BN affine + SReLU epilogue.

    p_ref     : (TM, K)        bf16  im2col patch tile
    w_ref     : (K, Cout_pad)  bf16  folded conv weight (lane-padded)
    scale_ref : (1, Cout_pad)  f32   BN gamma / sqrt(var + eps)   (zero-padded)
    bias_ref  : (1, Cout_pad)  f32   BN beta - mean * scale       (zero-padded)
    o_ref     : (TM, Cout_pad) f32   lane-dense output tile
    """
    # Single K=KH*KW*Cin contraction on the MXU, f32 accumulation.
    acc = jnp.dot(p_ref[...], w_ref[...], preferred_element_type=jnp.float32)

    # BatchNorm (inference) folded into a per-output-channel affine, in f32.
    y = acc * scale_ref[...] + bias_ref[...]

    # SReLU: alpha*(x - relu(-x)) + relu(x) + beta*(x - relu(-beta*x))*sigmoid(x)
    neg = ALPHA * (y - jnp.maximum(-y, 0.0))
    pos = jnp.maximum(y, 0.0)
    sig = jax.nn.sigmoid(y)                      # lowers to EUP (own VLIW slot)
    trans = BETA * (y - jnp.maximum(-BETA * y, 0.0)) * sig

    o_ref[...] = (neg + pos + trans).astype(o_ref.dtype)


def conv_bn_relu(x_nchw, conv_w, gamma, beta_bn, running_mean, running_var,
                 *, stride=1, padding=0, tile_rows=256):
    """ConvBnRelu forward. x_nchw: [N, Cin, H, W], conv_w: [Cout, Cin, KH, KW]."""
    N, Cin, H, W = x_nchw.shape
    Cout, _, KH, KW = conv_w.shape
    Ho = (H + 2 * padding - KH) // stride + 1
    Wo = (W + 2 * padding - KW) // stride + 1

    # ---- wrapper glue (plain XLA): layout, padding, im2col, BN folding ----
    x = jnp.transpose(x_nchw, (0, 2, 3, 1))                      # NCHW -> NHWC
    x = jnp.pad(x, ((0, 0), (padding, padding), (padding, padding), (0, 0)))

    # im2col: column index = (kh*KW + kw)*Cin + ci  (matches weight reshape below).
    taps = []
    for kh in range(KH):
        for kw in range(KW):
            taps.append(x[:,
                          kh:kh + (Ho - 1) * stride + 1:stride,
                          kw:kw + (Wo - 1) * stride + 1:stride,
                          :])
    K = KH * KW * Cin
    rows = N * Ho * Wo
    patches = jnp.concatenate(taps, axis=-1).reshape(rows, K)

    # Lane-dense channel padding and row padding to a whole number of tiles.
    Cp = _round_up(Cout, LANE)
    TM = min(tile_rows, _round_up(rows, 8))
    rows_pad = _round_up(rows, TM)

    patches = jnp.pad(patches, ((0, rows_pad - rows), (0, 0))).astype(jnp.bfloat16)

    w2d = jnp.transpose(conv_w, (2, 3, 1, 0)).reshape(K, Cout)   # row = kh*KW*Cin+kw*Cin+ci
    w2d = jnp.pad(w2d, ((0, 0), (0, Cp - Cout))).astype(jnp.bfloat16)

    scale = (gamma / jnp.sqrt(running_var + EPS)).astype(jnp.float32)
    bias = (beta_bn - running_mean * scale).astype(jnp.float32)
    scale = jnp.pad(scale, (0, Cp - Cout)).reshape(1, Cp)
    bias = jnp.pad(bias, (0, Cp - Cout)).reshape(1, Cp)

    grid = (rows_pad // TM,)
    out2d = pl.pallas_call(
        conv_bn_srelu_kernel,
        out_shape=jax.ShapeDtypeStruct((rows_pad, Cp), jnp.float32),
        grid_spec=pltpu.PrefetchScalarGridSpec(
            num_scalar_prefetch=0,
            grid=grid,
            in_specs=[
                pl.BlockSpec((TM, K), lambda i: (i, 0)),   # patch row tile
                pl.BlockSpec((K, Cp), lambda i: (0, 0)),   # resident weights
                pl.BlockSpec((1, Cp), lambda i: (0, 0)),   # BN scale
                pl.BlockSpec((1, Cp), lambda i: (0, 0)),   # BN bias
            ],
            out_specs=pl.BlockSpec((TM, Cp), lambda i: (i, 0)),
        ),
        compiler_params=pltpu.CompilerParams(
            dimension_semantics=("parallel",),             # megacore on v7x
            vmem_limit_bytes=32 * 1024 * 1024,             # safe on v7x's 64 MiB VMEM
        ),
    )(patches, w2d, scale, bias)

    out = out2d[:rows, :Cout].reshape(N, Ho, Wo, Cout)
    return jnp.transpose(out, (0, 3, 1, 2))                # NHWC -> NCHW


def _reference(x, w, gamma, beta_bn, mean, var, *, stride, padding):
    """Pure-JAX f32 reference matching PyTorch ConvBnRelu (eval-mode BN)."""
    y = jax.lax.conv_general_dilated(
        x.astype(jnp.float32), w.astype(jnp.float32),
        window_strides=(stride, stride),
        padding=[(padding, padding), (padding, padding)],
        dimension_numbers=('NCHW', 'OIHW', 'NCHW'))
    c = lambda v: v[None, :, None, None]
    y = (y - c(mean)) / jnp.sqrt(c(var) + EPS) * c(gamma) + c(beta_bn)
    neg = ALPHA * (y - jnp.maximum(-y, 0.0))
    pos = jnp.maximum(y, 0.0)
    trans = BETA * (y - jnp.maximum(-BETA * y, 0.0)) * jax.nn.sigmoid(y)
    return neg + pos + trans


if __name__ == "__main__":
    # Module config: ConvBnRelu(in_planes=4, out_planes=8, kernel_size=3, stride=1, padding=1)
    N, Cin, H, W = 2, 4, 16, 16
    Cout, KH, KW = 8, 3, 3
    stride, padding = 1, 1

    key = jax.random.PRNGKey(0)
    kx, kw, kg, kb, km, kv = jax.random.split(key, 6)

    x = jax.random.normal(kx, (N, Cin, H, W), dtype=jnp.float32)
    conv_w = 0.1 * jax.random.normal(kw, (Cout, Cin, KH, KW), dtype=jnp.float32)
    gamma = 0.5 + jax.random.uniform(kg, (Cout,), dtype=jnp.float32)
    beta_bn = 0.1 * jax.random.normal(kb, (Cout,), dtype=jnp.float32)
    running_mean = 0.1 * jax.random.normal(km, (Cout,), dtype=jnp.float32)
    running_var = 0.5 + jax.random.uniform(kv, (Cout,), dtype=jnp.float32)

    out = conv_bn_relu(x, conv_w, gamma, beta_bn, running_mean, running_var,
                       stride=stride, padding=padding)
    out = jax.block_until_ready(out)

    ref = _reference(x, conv_w, gamma, beta_bn, running_mean, running_var,
                     stride=stride, padding=padding)
    assert out.shape == (N, Cout, H, W), out.shape
    # Tolerance loosened vs the pure-f32 version because the MXU inputs are bf16.
    assert jnp.allclose(out, ref, atol=5e-2, rtol=5e-2), \
        float(jnp.max(jnp.abs(out - ref)))

    print("KERNEL_OK")
</pallas_src>

<mosaic_0001>
module attributes {stable_mosaic.version = 11 : i64} {
  func.func @conv_bn_srelu_kernel(%arg0: i32, %arg1: memref<256x36xbf16, #tpu.memory_space<vmem>>, %arg2: memref<36x128xbf16, #tpu.memory_space<vmem>>, %arg3: memref<1x128xf32, #tpu.memory_space<vmem>>, %arg4: memref<1x128xf32, #tpu.memory_space<vmem>>, %arg5: memref<256x128xf32, #tpu.memory_space<vmem>>) attributes {dimension_semantics = [#tpu.dimension_semantics<parallel>], iteration_bounds = array<i64: 2>, scalar_prefetch = 0 : i64, scratch_operands = 0 : i64, tpu.core_type = #tpu.core_type<tc>, window_params = [{transform_indices = @transform_0, window_bounds = array<i64: 256, 36>}, {pipeline_mode = #tpu.pipeline_mode<synchronous>, transform_indices = @transform_1, window_bounds = array<i64: 36, 128>}, {pipeline_mode = #tpu.pipeline_mode<synchronous>, transform_indices = @transform_2, window_bounds = array<i64: 1, 128>}, {pipeline_mode = #tpu.pipeline_mode<synchronous>, transform_indices = @transform_3, window_bounds = array<i64: 1, 128>}, {transform_indices = @transform_4, window_bounds = array<i64: 256, 128>}]} {
    %c0 = arith.constant 0 : index
    %c0_0 = arith.constant 0 : index
    %0 = vector.load %arg1[%c0, %c0_0] : memref<256x36xbf16, #tpu.memory_space<vmem>>, vector<256x36xbf16>
    %c0_1 = arith.constant 0 : index
    %c0_2 = arith.constant 0 : index
    %1 = vector.load %arg2[%c0_1, %c0_2] : memref<36x128xbf16, #tpu.memory_space<vmem>>, vector<36x128xbf16>
    %cst = arith.constant dense<0.000000e+00> : vector<256x128xf32>
    %2 = tpu.matmul %0, %1, %cst {dimension_numbers = #tpu.dot_dimension_numbers<[1], [0], [0], [1], [0, 0, 1, 1], [], []>} : vector<256x36xbf16>, vector<36x128xbf16>, vector<256x128xf32> -> vector<256x128xf32>
    %c0_3 = arith.constant 0 : index
    %c0_4 = arith.constant 0 : index
    %3 = vector.load %arg3[%c0_3, %c0_4] : memref<1x128xf32, #tpu.memory_space<vmem>>, vector<1x128xf32>
    %4 = vector.broadcast %3 : vector<1x128xf32> to vector<256x128xf32>
    %5 = arith.mulf %2, %4 : vector<256x128xf32>
    %c0_5 = arith.constant 0 : index
    %c0_6 = arith.constant 0 : index
    %6 = vector.load %arg4[%c0_5, %c0_6] : memref<1x128xf32, #tpu.memory_space<vmem>>, vector<1x128xf32>
    %7 = vector.broadcast %6 : vector<1x128xf32> to vector<256x128xf32>
    %8 = arith.addf %5, %7 : vector<256x128xf32>
    %cst_7 = arith.constant 0.000000e+00 : f32
    %9 = vector.broadcast %cst_7 : f32 to vector<256x128xf32>
    %10 = arith.subf %9, %8 : vector<256x128xf32>
    %cst_8 = arith.constant 0.000000e+00 : f32
    %11 = vector.broadcast %cst_8 : f32 to vector<256x128xf32>
    %12 = arith.maximumf %10, %11 : vector<256x128xf32>
    %13 = arith.subf %8, %12 : vector<256x128xf32>
    %cst_9 = arith.constant 1.000000e-01 : f32
    %14 = vector.broadcast %cst_9 : f32 to vector<256x128xf32>
    %15 = arith.mulf %14, %13 : vector<256x128xf32>
    %cst_10 = arith.constant 0.000000e+00 : f32
    %16 = vector.broadcast %cst_10 : f32 to vector<256x128xf32>
    %17 = arith.maximumf %8, %16 : vector<256x128xf32>
    %18 = arith.negf %8 : vector<256x128xf32>
    %19 = math.exp %18 : vector<256x128xf32>
    %cst_11 = arith.constant 1.000000e+00 : f32
    %20 = vector.broadcast %cst_11 : f32 to vector<256x128xf32>
    %21 = arith.addf %20, %19 : vector<256x128xf32>
    %22 = arith.divf %20, %21 : vector<256x128xf32>
    %cst_12 = arith.constant -8.000000e-01 : f32
    %23 = vector.broadcast %cst_12 : f32 to vector<256x128xf32>
    %24 = arith.mulf %23, %8 : vector<256x128xf32>
    %cst_13 = arith.constant 0.000000e+00 : f32
    %25 = vector.broadcast %cst_13 : f32 to vector<256x128xf32>
    %26 = arith.maximumf %24, %25 : vector<256x128xf32>
    %27 = arith.subf %8, %26 : vector<256x128xf32>
    %cst_14 = arith.constant 8.000000e-01 : f32
    %28 = vector.broadcast %cst_14 : f32 to vector<256x128xf32>
    %29 = arith.mulf %28, %27 : vector<256x128xf32>
    %30 = arith.mulf %29, %22 : vector<256x128xf32>
    %31 = arith.addf %15, %17 : vector<256x128xf32>
    %32 = arith.addf %31, %30 : vector<256x128xf32>
    %c0_15 = arith.constant 0 : index
    %c0_16 = arith.constant 0 : index
    %33 = vector.load %arg5[%c0_15, %c0_16] : memref<256x128xf32, #tpu.memory_space<vmem>>, vector<256x128xf32>
    tpu.vector_store %arg5[%c0_15, %c0_16], %32 {strides = array<i32>} : memref<256x128xf32, #tpu.memory_space<vmem>>, vector<256x128xf32>,
    return
  }
  func.func @transform_0(%arg0: i32) -> (i32, i32) {
    %c0_i32 = arith.constant 0 : i32
    %c0_i32_0 = arith.constant 0 : i32
    return %arg0, %c0_i32 : i32, i32
  }
  func.func @transform_1(%arg0: i32) -> (i32, i32) {
    %c0_i32 = arith.constant 0 : i32
    %c0_i32_0 = arith.constant 0 : i32
    %c0_i32_1 = arith.constant 0 : i32
    return %c0_i32, %c0_i32_0 : i32, i32
  }
  func.func @transform_2(%arg0: i32) -> (i32, i32) {
    %c0_i32 = arith.constant 0 : i32
    %c0_i32_0 = arith.constant 0 : i32
    %c0_i32_1 = arith.constant 0 : i32
    return %c0_i32, %c0_i32_0 : i32, i32
  }
  func.func @transform_3(%arg0: i32) -> (i32, i32) {
    %c0_i32 = arith.constant 0 : i32
    %c0_i32_0 = arith.constant 0 : i32
    %c0_i32_1 = arith.constant 0 : i32
    return %c0_i32, %c0_i32_0 : i32, i32
  }
  func.func @transform_4(%arg0: i32) -> (i32, i32) {
    %c0_i32 = arith.constant 0 : i32
    %c0_i32_0 = arith.constant 0 : i32
    return %arg0, %c0_i32 : i32, i32
  }
}

</mosaic_0001>

<llo_original>
// kernel: tpu_custom_call.1
$region0: #{tpu_custom_call.1}
  #allocation0 [shape = 'u32[]', space=smem, size = 0x4, offset = 0x4, fixed_abs, tag = 'smem constant byte address 0x4 - core index']
  #allocation1 [shape = 'u32[144,128]{1,0:T(1,128)}', space=vmem, size = 0x12000, scoped, tag = 'internal scratch']
  %s0 = inlined_call_operand.vmem [shape: bf16[512,36], index: 0, kind: input, shape index: {}]
  %s1 = inlined_call_operand.vmem [shape: bf16[36,128], index: 1, kind: input, shape index: {}]
  %s2 = inlined_call_operand.vmem [shape: f32[1,128], index: 2, kind: input, shape index: {}]
  %s3 = inlined_call_operand.vmem [shape: f32[1,128], index: 3, kind: input, shape index: {}]
  %s4 = inlined_call_operand.hbm [shape: f32[512,128], index: 4, kind: output, shape index: {}]
  %s5 = sld [smem:[#allocation0]]
  $region49: #{tpu_custom_call.1} parent=0
    _
  %s7 = ssub.s32 1, %s5
  %s8 = scalar_select 0, %s7, %s5
  $region1: #{tpu_custom_call.1} parent=0
    #allocation2 [shape = 'u8[262144]{0}', space=vmem, size = 0x40000, scoped, tag = 'output window, operand 0']
    #allocation3 [shape = 's32[2]{0}', space=sflag, size = 0x8, scoped, tag = 'scoped memory for tpu_custom_call.1']
    %9 = vsyncpa [#allocation3], 0
    %s10 = scalar_lea.sflag [#allocation3], 1
    %11 = vsyncpa %s10, 0
    loop: start=0, step=1, limit=4
    $region2: #{tpu_custom_call.1} parent=1 // loop_pre_header
      _
    $region3: #{tpu_custom_call.1} parent=1 // loop_header
      %s13 = sphi 0, %s17
      %p14 = scmp.ge.s32.totalorder %s13, 4
      %s23 = sphi 0, %s25
      %s26 = sphi 0, %s23
      %s27 = sphi 0, %s26
      %s43 = sphi 0, %s27
      %s47 = sphi 0, %s47
      %s49 = sphi 0, %s47
      %s50 = sphi 0, %s49
      %s64 = sphi 0, %s50
      %s68 = sphi 0, %s68
      %s70 = sphi 0, %s68
      %s71 = sphi 0, %s70
      %s85 = sphi 0, %s71
      %s89 = sphi 0, %s89
      %s91 = sphi 0, %s89
      %s92 = sphi 0, %s91
      %s106 = sphi 0, %s92
      %s112 = sphi 0, %s114
      %s115 = sphi 0, %s112
      %s116 = sphi 0, %s115
      %s132 = sphi 0, %s116
    $region4: #{tpu_custom_call.1} parent=1 // loop_header_branch
      %16 = sbr.rel (%p14) target = $region8
    $region5: #{tpu_custom_call.1} parent=1 // loop_body
      %s18 = ssub.s32 %s13, 1
      %s19 = ssub.s32 %s13, 2
      %s20 = sadd.s32 %s13, 1
      %s21 = ssub.s32 %s13, %s20
      %p22 = scmp.eq.s32.totalorder %s21, 0
      %s24 = sadd.s32 %s23, 1
      %s25 = scalar_select %p22, %s23, %s24
      %p28 = pneg %p22
      %p29 = scmp.eq.s32.totalorder %s13, 1
      %p30 = por %p28, %p29
      %p31 = scmp.ne.s32.totalorder %s23, %s26
      %p32 = scmp.eq.s32.totalorder %s13, 0
      %p33 = por %p31, %p32
      %p34 = scmp.ne.s32.totalorder %s23, %s26
      %p35 = scmp.eq.s32.totalorder %s18, 1
      %p36 = por %p34, %p35
      %p37 = scmp.ne.s32.totalorder %s26, %s27
      %p38 = scmp.eq.s32.totalorder %s18, 0
      %p39 = por %p37, %p38
      %p40 = scmp.ne.s32.totalorder %s26, %s27
      %p41 = scmp.eq.s32.totalorder %s19, 1
      %p42 = por %p40, %p41
      %p44 = scmp.ne.s32.totalorder %s27, %s43
      %p45 = scmp.eq.s32.totalorder %s19, 0
      %p46 = por %p44, %p45
      %s48 = sadd.s32 %s47, 1
      %p51 = scmp.eq.s32.totalorder %s13, 1
      %p52 = scmp.ne.s32.totalorder %s47, %s49
      %p53 = scmp.eq.s32.totalorder %s13, 0
      %p54 = por %p52, %p53
      %p55 = scmp.ne.s32.totalorder %s47, %s49
      %p56 = scmp.eq.s32.totalorder %s18, 1
      %p57 = por %p55, %p56
      %p58 = scmp.ne.s32.totalorder %s49, %s50
      %p59 = scmp.eq.s32.totalorder %s18, 0
      %p60 = por %p58, %p59
      %p61 = scmp.ne.s32.totalorder %s49, %s50
      %p62 = scmp.eq.s32.totalorder %s19, 1
      %p63 = por %p61, %p62
      %p65 = scmp.ne.s32.totalorder %s50, %s64
      %p66 = scmp.eq.s32.totalorder %s19, 0
      %p67 = por %p65, %p66
      %s69 = sadd.s32 %s68, 1
      %p72 = scmp.eq.s32.totalorder %s13, 1
      %p73 = scmp.ne.s32.totalorder %s68, %s70
      %p74 = scmp.eq.s32.totalorder %s13, 0
      %p75 = por %p73, %p74
      %p76 = scmp.ne.s32.totalorder %s68, %s70
      %p77 = scmp.eq.s32.totalorder %s18, 1
      %p78 = por %p76, %p77
      %p79 = scmp.ne.s32.totalorder %s70, %s71
      %p80 = scmp.eq.s32.totalorder %s18, 0
      %p81 = por %p79, %p80
      %p82 = scmp.ne.s32.totalorder %s70, %s71
      %p83 = scmp.eq.s32.totalorder %s19, 1
      %p84 = por %p82, %p83
      %p86 = scmp.ne.s32.totalorder %s71, %s85
      %p87 = scmp.eq.s32.totalorder %s19, 0
      %p88 = por %p86, %p87
      %s90 = sadd.s32 %s89, 1
      %p93 = scmp.eq.s32.totalorder %s13, 1
      %p94 = scmp.ne.s32.totalorder %s89, %s91
      %p95 = scmp.eq.s32.totalorder %s13, 0
      %p96 = por %p94, %p95
      %p97 = scmp.ne.s32.totalorder %s89, %s91
      %p98 = scmp.eq.s32.totalorder %s18, 1
      %p99 = por %p97, %p98
      %p100 = scmp.ne.s32.totalorder %s91, %s92
      %p101 = scmp.eq.s32.totalorder %s18, 0
      %p102 = por %p100, %p101
      %p103 = scmp.ne.s32.totalorder %s91, %s92
      %p104 = scmp.eq.s32.totalorder %s19, 1
      %p105 = por %p103, %p104
      %p107 = scmp.ne.s32.totalorder %s92, %s106
      %p108 = scmp.eq.s32.totalorder %s19, 0
      %p109 = por %p107, %p108
      %s110 = ssub.s32 %s13, %s20
      %p111 = scmp.eq.s32.totalorder %s110, 0
      %s113 = sadd.s32 %s112, 1
      %s114 = scalar_select %p111, %s112, %s113
      %p117 = pneg %p111
      %p118 = scmp.eq.s32.totalorder %s13, 1
      %p119 = por %p117, %p118
      %p120 = scmp.ne.s32.totalorder %s112, %s115
      %p121 = scmp.eq.s32.totalorder %s13, 0
      %p122 = por %p120, %p121
      %p123 = scmp.ne.s32.totalorder %s112, %s115
      %p124 = scmp.eq.s32.totalorder %s18, 1
      %p125 = por %p123, %p124
      %p126 = scmp.ne.s32.totalorder %s115, %s116
      %p127 = scmp.eq.s32.totalorder %s18, 0
      %p128 = por %p126, %p127
      %p129 = scmp.ne.s32.totalorder %s115, %s116
      %p130 = scmp.eq.s32.totalorder %s19, 1
      %p131 = por %p129, %p130
      %p133 = scmp.ne.s32.totalorder %s116, %s132
      %p134 = scmp.eq.s32.totalorder %s19, 0
      %p135 = por %p133, %p134
      %p136 = scmp.le.s32.totalorder 1, %s13
      %p137 = scmp.lt.s32.totalorder %s13, 3
      %p138 = pnand %p136, %p137
      %p139 = pneg %p138
      // Predicated region
      $region9: #{tpu_custom_call.1} parent=5 // pred_check
        _
      $region10: #{tpu_custom_call.1} parent=5 // pred_check_branch
        %141 = sbr.rel (%p138) target = $region12
      $region11: #{tpu_custom_call.1} parent=5 // pred_region
        %s142 = ssub.s32 %s13, 1
        // Predicated region
        $region13: #{tpu_custom_call.1} parent=11 // pred_check
          %p143 = pneg %p60
        $region14: #{tpu_custom_call.1} parent=11 // pred_check_branch
          %145 = sbr.rel (%p143) target = $region16
        $region15: #{tpu_custom_call.1} parent=11 // pred_region
          _
        $region16: #{tpu_custom_call.1} parent=11 // pred_fallthru
          _
        // Predicated region
        $region17: #{tpu_custom_call.1} parent=11 // pred_check
          %p146 = pneg %p81
        $region18: #{tpu_custom_call.1} parent=11 // pred_check_branch
          %148 = sbr.rel (%p146) target = $region20
        $region19: #{tpu_custom_call.1} parent=11 // pred_region
          _
        $region20: #{tpu_custom_call.1} parent=11 // pred_fallthru
          _
        // Predicated region
        $region21: #{tpu_custom_call.1} parent=11 // pred_check
          %p149 = pneg %p102
        $region22: #{tpu_custom_call.1} parent=11 // pred_check_branch
          %151 = sbr.rel (%p149) target = $region24
        $region23: #{tpu_custom_call.1} parent=11 // pred_region
          _
        $region24: #{tpu_custom_call.1} parent=11 // pred_fallthru
          _
      $region12: #{tpu_custom_call.1} parent=5 // pred_fallthru
        _
      %p152 = scmp.lt.s32.totalorder %s13, 2
      // Predicated region
      $region25: #{tpu_custom_call.1} parent=5 // pred_check
        %p153 = pneg %p152
      $region26: #{tpu_custom_call.1} parent=5 // pred_check_branch
        %155 = sbr.rel (%p153) target = $region28
      $region27: #{tpu_custom_call.1} parent=5 // pred_region
        // Predicated region
        $region29: #{tpu_custom_call.1} parent=27 // pred_check
          %p156 = pneg %p33
        $region30: #{tpu_custom_call.1} parent=27 // pred_check_branch
          %158 = sbr.rel (%p156) target = $region32
        $region31: #{tpu_custom_call.1} parent=27 // pred_region
          %s159 = smul.u32 32, %s13
          %p160 = scmp.lt.s32.totalorder %s159, 63
          %s161 = scalar_select %p160, %s159, 63
          %s162 = smul.addr %s161, 4
          %s163 = scalar_lea.vmem %s0, %s162
          %s164 = smul.u32 32, %s13
        $region32: #{tpu_custom_call.1} parent=27 // pred_fallthru
          _
      $region28: #{tpu_custom_call.1} parent=5 // pred_fallthru
        _
      %p165 = scmp.le.s32.totalorder 1, %s13
      %p166 = scmp.lt.s32.totalorder %s13, 3
      %p167 = pnand %p165, %p166
      %p168 = pneg %p167
      // Predicated region
      $region33: #{tpu_custom_call.1} parent=5 // pred_check
        _
      $region34: #{tpu_custom_call.1} parent=5 // pred_check_branch
        %170 = sbr.rel (%p167) target = $region36
      $region35: #{tpu_custom_call.1} parent=5 // pred_region
        %s171 = ssub.s32 %s13, 1
        %s172 = smul.u32 32, %s18
        %p173 = scmp.lt.s32.totalorder %s172, 63
        %s174 = scalar_select %p173, %s172, 63
        %s175 = smul.addr %s174, 4
        %s176 = scalar_lea.vmem %s0, %s175
        %p177 = pneg %p39
        %p178 = pneg %p36
        %p179 = pneg %p60
        %p180 = pneg %p57
        %p181 = pneg %p81
        %p182 = pneg %p78
        %p183 = pneg %p102
        %p184 = pneg %p99
        %p185 = pneg %p128
        %p186 = pneg %p125
        %s187 = sand.u32 %s115, 1
        %s188 = scalar_lea.sflag [#allocation3], %s187
        %s189 = sand.u32 %s115, 1
        %s190 = smul.addr %s189, 256
        %s191 = scalar_lea.vmem [#allocation2], %s190
        %s192 = smul.u32 32, %s18
        %p193 = scmp.lt.s32.totalorder %s192, 63
        %s194 = scalar_select %p193, %s192, 63
        %s195 = smul.addr %s194, 4
        %s196 = scalar_lea.vmem %s0, %s195
        %s197 = smul.u32 32, %s18
        %s198 = smul.u32 32, %s18
        %v200 = vld [vmem:[%s196] sm:$0xf]
        %v201 = vld [vmem:[%s196 + $0x4] sm:$0xf]
        %v202 = vld [vmem:[%s196 + $0x8] sm:$0xf]
        %v203 = vld [vmem:[%s196 + $0xc] sm:$0xf]
        %v204 = vld [vmem:[%s196 + $0x10] sm:$0xf]
        %v205 = vld [vmem:[%s196 + $0x14] sm:$0xf]
        %v206 = vld [vmem:[%s196 + $0x18] sm:$0xf]
        %v207 = vld [vmem:[%s196 + $0x1c] sm:$0xf]
        %v208 = vld [vmem:[%s196 + $0x20] sm:$0xf]
        %v209 = vld [vmem:[%s196 + $0x24] sm:$0xf]
        %v210 = vld [vmem:[%s196 + $0x28] sm:$0xf]
        %v211 = vld [vmem:[%s196 + $0x2c] sm:$0xf]
        %v212 = vld [vmem:[%s196 + $0x30] sm:$0xf]
        %v213 = vld [vmem:[%s196 + $0x34] sm:$0xf]
        %v214 = vld [vmem:[%s196 + $0x38] sm:$0xf]
        %v215 = vld [vmem:[%s196 + $0x3c] sm:$0xf]
        %v216 = vld [vmem:[%s196 + $0x40] sm:$0xf]
        %v217 = vld [vmem:[%s196 + $0x44] sm:$0xf]
        %v218 = vld [vmem:[%s196 + $0x48] sm:$0xf]
        %v219 = vld [vmem:[%s196 + $0x4c] sm:$0xf]
        %v220 = vld [vmem:[%s196 + $0x50] sm:$0xf]
        %v221 = vld [vmem:[%s196 + $0x54] sm:$0xf]
        %v222 = vld [vmem:[%s196 + $0x58] sm:$0xf]
        %v223 = vld [vmem:[%s196 + $0x5c] sm:$0xf]
        %v224 = vld [vmem:[%s196 + $0x60] sm:$0xf]
        %v225 = vld [vmem:[%s196 + $0x64] sm:$0xf]
        %v226 = vld [vmem:[%s196 + $0x68] sm:$0xf]
        %v227 = vld [vmem:[%s196 + $0x6c] sm:$0xf]
        %v228 = vld [vmem:[%s196 + $0x70] sm:$0xf]
        %v229 = vld [vmem:[%s196 + $0x74] sm:$0xf]
        %v230 = vld [vmem:[%s196 + $0x78] sm:$0xf]
        %v231 = vld [vmem:[%s196 + $0x7c] sm:$0xf]
        %v232 = vld [vmem:[%s1] sm:$0xf]
        %v233 = vld [vmem:[%s1 + $0x4] sm:$0xf]
        %v234 = vld [vmem:[%s1 + $0x8] sm:$0xf]
        %v235 = vld [vmem:[%s1 + $0xc] sm:$0xf]
        %v236 = vld [vmem:[%s1 + $0x10] sm:$0x3]
        %v269 = vunpack.c.l.b16 %v200
        %v270 = vunpack.c.l.b16 %v201
        %v271 = vunpack.c.l.b16 %v202
        %v272 = vunpack.c.l.b16 %v203
        %v273 = vunpack.c.l.b16 %v204
        %v274 = vunpack.c.l.b16 %v205
        %v275 = vunpack.c.l.b16 %v206
        %v276 = vunpack.c.l.b16 %v207
        %v277 = vunpack.c.l.b16 %v208
        %v278 = vunpack.c.l.b16 %v209
        %v279 = vunpack.c.l.b16 %v210
        %v280 = vunpack.c.l.b16 %v211
        %v281 = vunpack.c.l.b16 %v212
        %v282 = vunpack.c.l.b16 %v213
        %v283 = vunpack.c.l.b16 %v214
        %v284 = vunpack.c.l.b16 %v215
        %v285 = vunpack.c.l.b16 %v216
        %v286 = vunpack.c.l.b16 %v217
        %v287 = vunpack.c.l.b16 %v218
        %v288 = vunpack.c.l.b16 %v219
        %v289 = vunpack.c.l.b16 %v220
        %v290 = vunpack.c.l.b16 %v221
        %v291 = vunpack.c.l.b16 %v222
        %v292 = vunpack.c.l.b16 %v223
        %v293 = vunpack.c.l.b16 %v224
        %v294 = vunpack.c.l.b16 %v225
        %v295 = vunpack.c.l.b16 %v226
        %v296 = vunpack.c.l.b16 %v227
        %v297 = vunpack.c.l.b16 %v228
        %v298 = vunpack.c.l.b16 %v229
        %v299 = vunpack.c.l.b16 %v230
        %v300 = vunpack.c.l.b16 %v231
        %v301 = vpack.c.b16 %v270, %v269
        %v302 = vpack.c.b16 %v272, %v271
        %v303 = vpack.c.b16 %v274, %v273
        %v304 = vpack.c.b16 %v276, %v275
        %v305 = vpack.c.b16 %v278, %v277
        %v306 = vpack.c.b16 %v280, %v279
        %v307 = vpack.c.b16 %v282, %v281
        %v308 = vpack.c.b16 %v284, %v283
        %v309 = vpack.c.b16 %v286, %v285
        %v310 = vpack.c.b16 %v288, %v287
        %v311 = vpack.c.b16 %v290, %v289
        %v312 = vpack.c.b16 %v292, %v291
        %v313 = vpack.c.b16 %v294, %v293
        %v314 = vpack.c.b16 %v296, %v295
        %v315 = vpack.c.b16 %v298, %v297
        %v316 = vpack.c.b16 %v300, %v299
        %v322 = vunpack.c.l.b16 %v232
        %v323 = vunpack.c.l.b16 %v233
        %v324 = vunpack.c.l.b16 %v234
        %v325 = vunpack.c.l.b16 %v235
        %v326 = vunpack.c.l.b16 %v236
        %v327 = vpack.c.b16 %v323, %v322
        %v328 = vpack.c.b16 %v325, %v324
        %v329 = vpack.c.b16 %v326, %v326
        %vm332 = vcmask 293888
        %v334 = vsel %vm332, %v301, 0
        %v337 = vsel %vm332, %v302, 0
        %v340 = vsel %vm332, %v303, 0
        %v343 = vsel %vm332, %v304, 0
        %v346 = vsel %vm332, %v305, 0
        %v349 = vsel %vm332, %v306, 0
        %v352 = vsel %vm332, %v307, 0
        %v355 = vsel %vm332, %v308, 0
        %v358 = vsel %vm332, %v309, 0
        %v361 = vsel %vm332, %v310, 0
        %v364 = vsel %vm332, %v311, 0
        %v367 = vsel %vm332, %v312, 0
        %v370 = vsel %vm332, %v313, 0
        %v373 = vsel %vm332, %v314, 0
        %v376 = vsel %vm332, %v315, 0
        %v379 = vsel %vm332, %v316, 0
        %vm381 = vcmask 1041408
        %v383 = vsel %vm381, %v329, 0
        %385 = vmatprep.subr.bf16.mxu0 0
        %386 = vmatpush1.bf16.msra.mxu0 0
        %387 = vmatprep.subr.bf16.mxu0 0
        %388 = vmatpush1.bf16.msra.mxu0 0
        %389 = vmatprep.subr.bf16.mxu0 0
        %390 = vmatpush1.bf16.msra.mxu0 0
        %391 = vmatprep.subr.bf16.mxu0 0
        %392 = vmatpush1.bf16.msra.mxu0 0
        %393 = vmatprep.subr.bf16.mxu0 0
        %394 = vmatpush1.bf16.msra.mxu0 0
        %395 = vmatprep.subr.bf16.mxu0 0
        %396 = vmatpush1.bf16.msra.mxu0 %v383
        %397 = vmatprep.subr.bf16.mxu0 0
        %398 = vmatpush1.bf16.msra.mxu0 %v328
        %399 = vmatprep.subr.bf16.mxu0 0
        %400 = vmatpush1.bf16.msra.mxu0 %v327
        %401 = vmatprep.subr.bf16.mxu0 0
        %402 = vmatpush2.bf16.msra.mxu0 0
        %403 = vmatprep.subr.bf16.mxu0 0
        %404 = vmatpush2.bf16.msra.mxu0 0
        %405 = vmatprep.subr.bf16.mxu0 0
        %406 = vmatpush2.bf16.msra.mxu0 0
        %407 = vmatprep.subr.bf16.mxu0 0
        %408 = vmatpush2.bf16.msra.mxu0 0
        %409 = vmatprep.subr.bf16.mxu0 0
        %410 = vmatpush2.bf16.msra.mxu0 0
        %411 = vmatprep.subr.bf16.mxu0 0
        %412 = vmatpush2.bf16.msra.mxu0 0
        %413 = vmatprep.subr.bf16.mxu0 0
        %414 = vmatpush2.bf16.msra.mxu0 0
        %415 = vmatprep.subr.bf16.mxu0 0
        %416 = vmatpush2.bf16.msra.mxu0 0
        %417 = vmatprep.mubr.bf16.mxu0 0
        %418 = vmatmul.mubr.bf16.gmra.mxu0 %v334
        %v419 = vpop.f32.mrf.mxu0
        %v420 = vadd.f32 0.0, %v419
        %v421 = vpop.f32.mrf.mxu0
        %v422 = vpop.f32.mrf.mxu0
        %v423 = vadd.f32 0.0, %v422
        %v424 = vpop.f32.mrf.mxu0
        %425 = vmatprep.mubr.bf16.mxu0 0
        %426 = vmatmul.mubr.bf16.gmra.mxu0 %v337
        %v427 = vpop.f32.mrf.mxu0
        %v428 = vadd.f32 0.0, %v427
        %v429 = vpop.f32.mrf.mxu0
        %v430 = vpop.f32.mrf.mxu0
        %v431 = vadd.f32 0.0, %v430
        %v432 = vpop.f32.mrf.mxu0
        %433 = vmatprep.mubr.bf16.mxu0 0
        %434 = vmatmul.mubr.bf16.gmra.mxu0 %v340
        %v435 = vpop.f32.mrf.mxu0
        %v436 = vadd.f32 0.0, %v435
        %v437 = vpop.f32.mrf.mxu0
        %v438 = vpop.f32.mrf.mxu0
        %v439 = vadd.f32 0.0, %v438
        %v440 = vpop.f32.mrf.mxu0
        %441 = vmatprep.mubr.bf16.mxu0 0
        %442 = vmatmul.mubr.bf16.gmra.mxu0 %v343
        %v443 = vpop.f32.mrf.mxu0
        %v444 = vadd.f32 0.0, %v443
        %v445 = vpop.f32.mrf.mxu0
        %v446 = vpop.f32.mrf.mxu0
        %v447 = vadd.f32 0.0, %v446
        %v448 = vpop.f32.mrf.mxu0
        %449 = vmatprep.mubr.bf16.mxu0 0
        %450 = vmatmul.mubr.bf16.gmra.mxu0 %v346
        %v451 = vpop.f32.mrf.mxu0
        %v452 = vadd.f32 0.0, %v451
        %v453 = vpop.f32.mrf.mxu0
        %v454 = vpop.f32.mrf.mxu0
        %v455 = vadd.f32 0.0, %v454
        %v456 = vpop.f32.mrf.mxu0
        %457 = vmatprep.mubr.bf16.mxu0 0
        %458 = vmatmul.mubr.bf16.gmra.mxu0 %v349
        %v459 = vpop.f32.mrf.mxu0
        %v460 = vadd.f32 0.0, %v459
        %v461 = vpop.f32.mrf.mxu0
        %v462 = vpop.f32.mrf.mxu0
        %v463 = vadd.f32 0.0, %v462
        %v464 = vpop.f32.mrf.mxu0
        %465 = vmatprep.mubr.bf16.mxu0 0
        %466 = vmatmul.mubr.bf16.gmra.mxu0 %v352
        %v467 = vpop.f32.mrf.mxu0
        %v468 = vadd.f32 0.0, %v467
        %v469 = vpop.f32.mrf.mxu0
        %v470 = vpop.f32.mrf.mxu0
        %v471 = vadd.f32 0.0, %v470
        %v472 = vpop.f32.mrf.mxu0
        %473 = vmatprep.mubr.bf16.mxu0 0
        %474 = vmatmul.mubr.bf16.gmra.mxu0 %v355
        %v475 = vpop.f32.mrf.mxu0
        %v476 = vadd.f32 0.0, %v475
        %v477 = vpop.f32.mrf.mxu0
        %v478 = vpop.f32.mrf.mxu0
        %v479 = vadd.f32 0.0, %v478
        %v480 = vpop.f32.mrf.mxu0
        %481 = vmatprep.mubr.bf16.mxu0 0
        %482 = vmatmul.mubr.bf16.gmra.mxu0 %v358
        %v483 = vpop.f32.mrf.mxu0
        %v484 = vadd.f32 0.0, %v483
        %v485 = vpop.f32.mrf.mxu0
        %v486 = vpop.f32.mrf.mxu0
        %v487 = vadd.f32 0.0, %v486
        %v488 = vpop.f32.mrf.mxu0
        %489 = vmatprep.mubr.bf16.mxu0 0
        %490 = vmatmul.mubr.bf16.gmra.mxu0 %v361
        %v491 = vpop.f32.mrf.mxu0
        %v492 = vadd.f32 0.0, %v491
        %v493 = vpop.f32.mrf.mxu0
        %v494 = vpop.f32.mrf.mxu0
        %v495 = vadd.f32 0.0, %v494
        %v496 = vpop.f32.mrf.mxu0
        %497 = vmatprep.mubr.bf16.mxu0 0
        %498 = vmatmul.mubr.bf16.gmra.mxu0 %v364
        %v499 = vpop.f32.mrf.mxu0
        %v500 = vadd.f32 0.0, %v499
        %v501 = vpop.f32.mrf.mxu0
        %v502 = vpop.f32.mrf.mxu0
        %v503 = vadd.f32 0.0, %v502
        %v504 = vpop.f32.mrf.mxu0
        %505 = vmatprep.mubr.bf16.mxu0 0
        %506 = vmatmul.mubr.bf16.gmra.mxu0 %v367
        %v507 = vpop.f32.mrf.mxu0
        %v508 = vadd.f32 0.0, %v507
        %v509 = vpop.f32.mrf.mxu0
        %v510 = vpop.f32.mrf.mxu0
        %v511 = vadd.f32 0.0, %v510
        %v512 = vpop.f32.mrf.mxu0
        %513 = vmatprep.mubr.bf16.mxu0 0
        %514 = vmatmul.mubr.bf16.gmra.mxu0 %v370
        %v515 = vpop.f32.mrf.mxu0
        %v516 = vadd.f32 0.0, %v515
        %v517 = vpop.f32.mrf.mxu0
        %v518 = vpop.f32.mrf.mxu0
        %v519 = vadd.f32 0.0, %v518
        %v520 = vpop.f32.mrf.mxu0
        %521 = vmatprep.mubr.bf16.mxu0 0
        %522 = vmatmul.mubr.bf16.gmra.mxu0 %v373
        %v523 = vpop.f32.mrf.mxu0
        %v524 = vadd.f32 0.0, %v523
        %v525 = vpop.f32.mrf.mxu0
        %v526 = vpop.f32.mrf.mxu0
        %v527 = vadd.f32 0.0, %v526
        %v528 = vpop.f32.mrf.mxu0
        %529 = vmatprep.mubr.bf16.mxu0 0
        %530 = vmatmul.mubr.bf16.gmra.mxu0 %v376
        %v531 = vpop.f32.mrf.mxu0
        %v532 = vadd.f32 0.0, %v531
        %v533 = vpop.f32.mrf.mxu0
        %v534 = vpop.f32.mrf.mxu0
        %v535 = vadd.f32 0.0, %v534
        %v536 = vpop.f32.mrf.mxu0
        %537 = vmatprep.mubr.bf16.mxu0 0
        %538 = vmatmul.mubr.bf16.gmra.mxu0 %v379
        %v539 = vpop.f32.mrf.mxu0
        %v540 = vadd.f32 0.0, %v539
        %v541 = vpop.f32.mrf.mxu0
        %v542 = vpop.f32.mrf.mxu0
        %v543 = vadd.f32 0.0, %v542
        %v544 = vpop.f32.mrf.mxu0
        %545 = vdwg.mxu0
        %v546 = vld [vmem:[%s2] sm:$0x1]
        %v548 = vlaneseq
        %v549 = vshrl.u32 %v548, 7
        %v550 = vsub.s32 0, %v549
        %v551 = vrot.slane %v546, %v550
        %v553 = vmul.f32 %v420, %v551
        %v554 = vmul.f32 %v423, %v551
        %v555 = vmul.f32 %v428, %v551
        %v556 = vmul.f32 %v431, %v551
        %v557 = vmul.f32 %v436, %v551
        %v558 = vmul.f32 %v439, %v551
        %v559 = vmul.f32 %v444, %v551
        %v560 = vmul.f32 %v447, %v551
        %v561 = vmul.f32 %v452, %v551
        %v562 = vmul.f32 %v455, %v551
        %v563 = vmul.f32 %v460, %v551
        %v564 = vmul.f32 %v463, %v551
        %v565 = vmul.f32 %v468, %v551
        %v566 = vmul.f32 %v471, %v551
        %v567 = vmul.f32 %v476, %v551
        %v568 = vmul.f32 %v479, %v551
        %v569 = vmul.f32 %v484, %v551
        %v570 = vmul.f32 %v487, %v551
        %v571 = vmul.f32 %v492, %v551
        %v572 = vmul.f32 %v495, %v551
        %v573 = vmul.f32 %v500, %v551
        %v574 = vmul.f32 %v503, %v551
        %v575 = vmul.f32 %v508, %v551
        %v576 = vmul.f32 %v511, %v551
        %v577 = vmul.f32 %v516, %v551
        %v578 = vmul.f32 %v519, %v551
        %v579 = vmul.f32 %v524, %v551
        %v580 = vmul.f32 %v527, %v551
        %v581 = vmul.f32 %v532, %v551
        %v582 = vmul.f32 %v535, %v551
        %v583 = vmul.f32 %v540, %v551
        %v584 = vmul.f32 %v543, %v551
        %v585 = vld [vmem:[%s3] sm:$0x1]
        %v587 = vlaneseq
        %v588 = vshrl.u32 %v587, 7
        %v589 = vsub.s32 0, %v588
        %v590 = vrot.slane %v585, %v589
        %v592 = vadd.f32 %v553, %v590
        %v593 = vadd.f32 %v554, %v590
        %v594 = vadd.f32 %v555, %v590
        %v595 = vadd.f32 %v556, %v590
        %v596 = vadd.f32 %v557, %v590
        %v597 = vadd.f32 %v558, %v590
        %v598 = vadd.f32 %v559, %v590
        %v599 = vadd.f32 %v560, %v590
        %v600 = vadd.f32 %v561, %v590
        %v601 = vadd.f32 %v562, %v590
        %v602 = vadd.f32 %v563, %v590
        %v603 = vadd.f32 %v564, %v590
        %v604 = vadd.f32 %v565, %v590
        %v605 = vadd.f32 %v566, %v590
        %v606 = vadd.f32 %v567, %v590
        %v607 = vadd.f32 %v568, %v590
        %v608 = vadd.f32 %v569, %v590
        %v609 = vadd.f32 %v570, %v590
        %v610 = vadd.f32 %v571, %v590
        %v611 = vadd.f32 %v572, %v590
        %v612 = vadd.f32 %v573, %v590
        %v613 = vadd.f32 %v574, %v590
        %v614 = vadd.f32 %v575, %v590
        %v615 = vadd.f32 %v576, %v590
        %v616 = vadd.f32 %v577, %v590
        %v617 = vadd.f32 %v578, %v590
        %v618 = vadd.f32 %v579, %v590
        %v619 = vadd.f32 %v580, %v590
        %v620 = vadd.f32 %v581, %v590
        %v621 = vadd.f32 %v582, %v590
        %v622 = vadd.f32 %v583, %v590
        %v623 = vadd.f32 %v584, %v590
        %v624 = vsub.f32 0.0, %v592
        %v625 = vsub.f32 0.0, %v593
        %v626 = vsub.f32 0.0, %v594
        %v627 = vsub.f32 0.0, %v595
        %v628 = vsub.f32 0.0, %v596
        %v629 = vsub.f32 0.0, %v597
        %v630 = vsub.f32 0.0, %v598
        %v631 = vsub.f32 0.0, %v599
        %v632 = vsub.f32 0.0, %v600
        %v633 = vsub.f32 0.0, %v601
        %v634 = vsub.f32 0.0, %v602
        %v635 = vsub.f32 0.0, %v603
        %v636 = vsub.f32 0.0, %v604
        %v637 = vsub.f32 0.0, %v605
        %v638 = vsub.f32 0.0, %v606
        %v639 = vsub.f32 0.0, %v607
        %v640 = vsub.f32 0.0, %v608
        %v641 = vsub.f32 0.0, %v609
        %v642 = vsub.f32 0.0, %v610
        %v643 = vsub.f32 0.0, %v611
        %v644 = vsub.f32 0.0, %v612
        %v645 = vsub.f32 0.0, %v613
        %v646 = vsub.f32 0.0, %v614
        %v647 = vsub.f32 0.0, %v615
        %v648 = vsub.f32 0.0, %v616
        %v649 = vsub.f32 0.0, %v617
        %v650 = vsub.f32 0.0, %v618
        %v651 = vsub.f32 0.0, %v619
        %v652 = vsub.f32 0.0, %v620
        %v653 = vsub.f32 0.0, %v621
        %v654 = vsub.f32 0.0, %v622
        %v655 = vsub.f32 0.0, %v623
        %v656 = vmax.f32 %v624, 0.0
        %v657 = vmax.f32 %v625, 0.0
        %v658 = vmax.f32 %v626, 0.0
        %v659 = vmax.f32 %v627, 0.0
        %v660 = vmax.f32 %v628, 0.0
        %v661 = vmax.f32 %v629, 0.0
        %v662 = vmax.f32 %v630, 0.0
        %v663 = vmax.f32 %v631, 0.0
        %v664 = vmax.f32 %v632, 0.0
        %v665 = vmax.f32 %v633, 0.0
        %v666 = vmax.f32 %v634, 0.0
        %v667 = vmax.f32 %v635, 0.0
        %v668 = vmax.f32 %v636, 0.0
        %v669 = vmax.f32 %v637, 0.0
        %v670 = vmax.f32 %v638, 0.0
        %v671 = vmax.f32 %v639, 0.0
        %v672 = vmax.f32 %v640, 0.0
        %v673 = vmax.f32 %v641, 0.0
        %v674 = vmax.f32 %v642, 0.0
        %v675 = vmax.f32 %v643, 0.0
        %v676 = vmax.f32 %v644, 0.0
        %v677 = vmax.f32 %v645, 0.0
        %v678 = vmax.f32 %v646, 0.0
        %v679 = vmax.f32 %v647, 0.0
        %v680 = vmax.f32 %v648, 0.0
        %v681 = vmax.f32 %v649, 0.0
        %v682 = vmax.f32 %v650, 0.0
        %v683 = vmax.f32 %v651, 0.0
        %v684 = vmax.f32 %v652, 0.0
        %v685 = vmax.f32 %v653, 0.0
        %v686 = vmax.f32 %v654, 0.0
        %v687 = vmax.f32 %v655, 0.0
        %v688 = vsub.f32 %v592, %v656
        %v689 = vsub.f32 %v593, %v657
        %v690 = vsub.f32 %v594, %v658
        %v691 = vsub.f32 %v595, %v659
        %v692 = vsub.f32 %v596, %v660
        %v693 = vsub.f32 %v597, %v661
        %v694 = vsub.f32 %v598, %v662
        %v695 = vsub.f32 %v599, %v663
        %v696 = vsub.f32 %v600, %v664
        %v697 = vsub.f32 %v601, %v665
        %v698 = vsub.f32 %v602, %v666
        %v699 = vsub.f32 %v603, %v667
        %v700 = vsub.f32 %v604, %v668
        %v701 = vsub.f32 %v605, %v669
        %v702 = vsub.f32 %v606, %v670
        %v703 = vsub.f32 %v607, %v671
        %v704 = vsub.f32 %v608, %v672
        %v705 = vsub.f32 %v609, %v673
        %v706 = vsub.f32 %v610, %v674
        %v707 = vsub.f32 %v611, %v675
        %v708 = vsub.f32 %v612, %v676
        %v709 = vsub.f32 %v613, %v677
        %v710 = vsub.f32 %v614, %v678
        %v711 = vsub.f32 %v615, %v679
        %v712 = vsub.f32 %v616, %v680
        %v713 = vsub.f32 %v617, %v681
        %v714 = vsub.f32 %v618, %v682
        %v715 = vsub.f32 %v619, %v683
        %v716 = vsub.f32 %v620, %v684
        %v717 = vsub.f32 %v621, %v685
        %v718 = vsub.f32 %v622, %v686
        %v719 = vsub.f32 %v623, %v687
        %v720 = vmul.f32 %v688, 0.1
        %v721 = vmul.f32 %v689, 0.1
        %v722 = vmul.f32 %v690, 0.1
        %v723 = vmul.f32 %v691, 0.1
        %v724 = vmul.f32 %v692, 0.1
        %v725 = vmul.f32 %v693, 0.1
        %v726 = vmul.f32 %v694, 0.1
        %v727 = vmul.f32 %v695, 0.1
        %v728 = vmul.f32 %v696, 0.1
        %v729 = vmul.f32 %v697, 0.1
        %v730 = vmul.f32 %v698, 0.1
        %v731 = vmul.f32 %v699, 0.1
        %v732 = vmul.f32 %v700, 0.1
        %v733 = vmul.f32 %v701, 0.1
        %v734 = vmul.f32 %v702, 0.1
        %v735 = vmul.f32 %v703, 0.1
        %v736 = vmul.f32 %v704, 0.1
        %v737 = vmul.f32 %v705, 0.1
        %v738 = vmul.f32 %v706, 0.1
        %v739 = vmul.f32 %v707, 0.1
        %v740 = vmul.f32 %v708, 0.1
        %v741 = vmul.f32 %v709, 0.1
        %v742 = vmul.f32 %v710, 0.1
        %v743 = vmul.f32 %v711, 0.1
        %v744 = vmul.f32 %v712, 0.1
        %v745 = vmul.f32 %v713, 0.1
        %v746 = vmul.f32 %v714, 0.1
        %v747 = vmul.f32 %v715, 0.1
        %v748 = vmul.f32 %v716, 0.1
        %v749 = vmul.f32 %v717, 0.1
        %v750 = vmul.f32 %v718, 0.1
        %v751 = vmul.f32 %v719, 0.1
        %v752 = vmax.f32 %v592, 0.0
        %v753 = vmax.f32 %v593, 0.0
        %v754 = vmax.f32 %v594, 0.0
        %v755 = vmax.f32 %v595, 0.0
        %v756 = vmax.f32 %v596, 0.0
        %v757 = vmax.f32 %v597, 0.0
        %v758 = vmax.f32 %v598, 0.0
        %v759 = vmax.f32 %v599, 0.0
        %v760 = vmax.f32 %v600, 0.0
        %v761 = vmax.f32 %v601, 0.0
        %v762 = vmax.f32 %v602, 0.0
        %v763 = vmax.f32 %v603, 0.0
        %v764 = vmax.f32 %v604, 0.0
        %v765 = vmax.f32 %v605, 0.0
        %v766 = vmax.f32 %v606, 0.0
        %v767 = vmax.f32 %v607, 0.0
        %v768 = vmax.f32 %v608, 0.0
        %v769 = vmax.f32 %v609, 0.0
        %v770 = vmax.f32 %v610, 0.0
        %v771 = vmax.f32 %v611, 0.0
        %v772 = vmax.f32 %v612, 0.0
        %v773 = vmax.f32 %v613, 0.0
        %v774 = vmax.f32 %v614, 0.0
        %v775 = vmax.f32 %v615, 0.0
        %v776 = vmax.f32 %v616, 0.0
        %v777 = vmax.f32 %v617, 0.0
        %v778 = vmax.f32 %v618, 0.0
        %v779 = vmax.f32 %v619, 0.0
        %v780 = vmax.f32 %v620, 0.0
        %v781 = vmax.f32 %v621, 0.0
        %v782 = vmax.f32 %v622, 0.0
        %v783 = vmax.f32 %v623, 0.0
        %v784 = vxor.u32 %v592, 2147483648
        %v785 = vxor.u32 %v593, 2147483648
        %v786 = vxor.u32 %v594, 2147483648
        %v787 = vxor.u32 %v595, 2147483648
        %v788 = vxor.u32 %v596, 2147483648
        %v789 = vxor.u32 %v597, 2147483648
        %v790 = vxor.u32 %v598, 2147483648
        %v791 = vxor.u32 %v599, 2147483648
        %v792 = vxor.u32 %v600, 2147483648
        %v793 = vxor.u32 %v601, 2147483648
        %v794 = vxor.u32 %v602, 2147483648
        %v795 = vxor.u32 %v603, 2147483648
        %v796 = vxor.u32 %v604, 2147483648
        %v797 = vxor.u32 %v605, 2147483648
        %v798 = vxor.u32 %v606, 2147483648
        %v799 = vxor.u32 %v607, 2147483648
        %v800 = vxor.u32 %v608, 2147483648
        %v801 = vxor.u32 %v609, 2147483648
        %v802 = vxor.u32 %v610, 2147483648
        %v803 = vxor.u32 %v611, 2147483648
        %v804 = vxor.u32 %v612, 2147483648
        %v805 = vxor.u32 %v613, 2147483648
        %v806 = vxor.u32 %v614, 2147483648
        %v807 = vxor.u32 %v615, 2147483648
        %v808 = vxor.u32 %v616, 2147483648
        %v809 = vxor.u32 %v617, 2147483648
        %v810 = vxor.u32 %v618, 2147483648
        %v811 = vxor.u32 %v619, 2147483648
        %v812 = vxor.u32 %v620, 2147483648
        %v813 = vxor.u32 %v621, 2147483648
        %v814 = vxor.u32 %v622, 2147483648
        %v815 = vxor.u32 %v623, 2147483648
        %v816 = vmul.f32 %v784, 1.442695
        %v817 = vpow.pop %v816
        %v818 = vmul.f32 %v785, 1.442695
        %v819 = vpow.pop %v818
        %v820 = vmul.f32 %v786, 1.442695
        %v821 = vpow.pop %v820
        %v822 = vmul.f32 %v787, 1.442695
        %v823 = vpow.pop %v822
        %v824 = vmul.f32 %v788, 1.442695
        %v825 = vpow.pop %v824
        %v826 = vmul.f32 %v789, 1.442695
        %v827 = vpow.pop %v826
        %v828 = vmul.f32 %v790, 1.442695
        %v829 = vpow.pop %v828
        %v830 = vmul.f32 %v791, 1.442695
        %v831 = vpow.pop %v830
        %v832 = vmul.f32 %v792, 1.442695
        %v833 = vpow.pop %v832
        %v834 = vmul.f32 %v793, 1.442695
        %v835 = vpow.pop %v834
        %v836 = vmul.f32 %v794, 1.442695
        %v837 = vpow.pop %v836
        %v838 = vmul.f32 %v795, 1.442695
        %v839 = vpow.pop %v838
        %v840 = vmul.f32 %v796, 1.442695
        %v841 = vpow.pop %v840
        %v842 = vmul.f32 %v797, 1.442695
        %v843 = vpow.pop %v842
        %v844 = vmul.f32 %v798, 1.442695
        %v845 = vpow.pop %v844
        %v846 = vmul.f32 %v799, 1.442695
        %v847 = vpow.pop %v846
        %v848 = vmul.f32 %v800, 1.442695
        %v849 = vpow.pop %v848
        %v850 = vmul.f32 %v801, 1.442695
        %v851 = vpow.pop %v850
        %v852 = vmul.f32 %v802, 1.442695
        %v853 = vpow.pop %v852
        %v854 = vmul.f32 %v803, 1.442695
        %v855 = vpow.pop %v854
        %v856 = vmul.f32 %v804, 1.442695
        %v857 = vpow.pop %v856
        %v858 = vmul.f32 %v805, 1.442695
        %v859 = vpow.pop %v858
        %v860 = vmul.f32 %v806, 1.442695
        %v861 = vpow.pop %v860
        %v862 = vmul.f32 %v807, 1.442695
        %v863 = vpow.pop %v862
        %v864 = vmul.f32 %v808, 1.442695
        %v865 = vpow.pop %v864
        %v866 = vmul.f32 %v809, 1.442695
        %v867 = vpow.pop %v866
        %v868 = vmul.f32 %v810, 1.442695
        %v869 = vpow.pop %v868
        %v870 = vmul.f32 %v811, 1.442695
        %v871 = vpow.pop %v870
        %v872 = vmul.f32 %v812, 1.442695
        %v873 = vpow.pop %v872
        %v874 = vmul.f32 %v813, 1.442695
        %v875 = vpow.pop %v874
        %v876 = vmul.f32 %v814, 1.442695
        %v877 = vpow.pop %v876
        %v878 = vmul.f32 %v815, 1.442695
        %v879 = vpow.pop %v878
        %v880 = vadd.f32 %v817, 1.0
        %v881 = vadd.f32 %v819, 1.0
        %v882 = vadd.f32 %v821, 1.0
        %v883 = vadd.f32 %v823, 1.0
        %v884 = vadd.f32 %v825, 1.0
        %v885 = vadd.f32 %v827, 1.0
        %v886 = vadd.f32 %v829, 1.0
        %v887 = vadd.f32 %v831, 1.0
        %v888 = vadd.f32 %v833, 1.0
        %v889 = vadd.f32 %v835, 1.0
        %v890 = vadd.f32 %v837, 1.0
        %v891 = vadd.f32 %v839, 1.0
        %v892 = vadd.f32 %v841, 1.0
        %v893 = vadd.f32 %v843, 1.0
        %v894 = vadd.f32 %v845, 1.0
        %v895 = vadd.f32 %v847, 1.0
        %v896 = vadd.f32 %v849, 1.0
        %v897 = vadd.f32 %v851, 1.0
        %v898 = vadd.f32 %v853, 1.0
        %v899 = vadd.f32 %v855, 1.0
        %v900 = vadd.f32 %v857, 1.0
        %v901 = vadd.f32 %v859, 1.0
        %v902 = vadd.f32 %v861, 1.0
        %v903 = vadd.f32 %v863, 1.0
        %v904 = vadd.f32 %v865, 1.0
        %v905 = vadd.f32 %v867, 1.0
        %v906 = vadd.f32 %v869, 1.0
        %v907 = vadd.f32 %v871, 1.0
        %v908 = vadd.f32 %v873, 1.0
        %v909 = vadd.f32 %v875, 1.0
        %v910 = vadd.f32 %v877, 1.0
        %v911 = vadd.f32 %v879, 1.0
        %v912 = vrcp.pop %v880
        %v913 = vmul.f32 1.0, %v912
        %v914 = vrcp.pop %v881
        %v915 = vmul.f32 1.0, %v914
        %v916 = vrcp.pop %v882
        %v917 = vmul.f32 1.0, %v916
        %v918 = vrcp.pop %v883
        %v919 = vmul.f32 1.0, %v918
        %v920 = vrcp.pop %v884
        %v921 = vmul.f32 1.0, %v920
        %v922 = vrcp.pop %v885
        %v923 = vmul.f32 1.0, %v922
        %v924 = vrcp.pop %v886
        %v925 = vmul.f32 1.0, %v924
        %v926 = vrcp.pop %v887
        %v927 = vmul.f32 1.0, %v926
        %v928 = vrcp.pop %v888
        %v929 = vmul.f32 1.0, %v928
        %v930 = vrcp.pop %v889
        %v931 = vmul.f32 1.0, %v930
        %v932 = vrcp.pop %v890
        %v933 = vmul.f32 1.0, %v932
        %v934 = vrcp.pop %v891
        %v935 = vmul.f32 1.0, %v934
        %v936 = vrcp.pop %v892
        %v937 = vmul.f32 1.0, %v936
        %v938 = vrcp.pop %v893
        %v939 = vmul.f32 1.0, %v938
        %v940 = vrcp.pop %v894
        %v941 = vmul.f32 1.0, %v940
        %v942 = vrcp.pop %v895
        %v943 = vmul.f32 1.0, %v942
        %v944 = vrcp.pop %v896
        %v945 = vmul.f32 1.0, %v944
        %v946 = vrcp.pop %v897
        %v947 = vmul.f32 1.0, %v946
        %v948 = vrcp.pop %v898
        %v949 = vmul.f32 1.0, %v948
        %v950 = vrcp.pop %v899
        %v951 = vmul.f32 1.0, %v950
        %v952 = vrcp.pop %v900
        %v953 = vmul.f32 1.0, %v952
        %v954 = vrcp.pop %v901
        %v955 = vmul.f32 1.0, %v954
        %v956 = vrcp.pop %v902
        %v957 = vmul.f32 1.0, %v956
        %v958 = vrcp.pop %v903
        %v959 = vmul.f32 1.0, %v958
        %v960 = vrcp.pop %v904
        %v961 = vmul.f32 1.0, %v960
        %v962 = vrcp.pop %v905
        %v963 = vmul.f32 1.0, %v962
        %v964 = vrcp.pop %v906
        %v965 = vmul.f32 1.0, %v964
        %v966 = vrcp.pop %v907
        %v967 = vmul.f32 1.0, %v966
        %v968 = vrcp.pop %v908
        %v969 = vmul.f32 1.0, %v968
        %v970 = vrcp.pop %v909
        %v971 = vmul.f32 1.0, %v970
        %v972 = vrcp.pop %v910
        %v973 = vmul.f32 1.0, %v972
        %v974 = vrcp.pop %v911
        %v975 = vmul.f32 1.0, %v974
        %v976 = vmul.f32 %v592, -0.8
        %v977 = vmul.f32 %v593, -0.8
        %v978 = vmul.f32 %v594, -0.8
        %v979 = vmul.f32 %v595, -0.8
        %v980 = vmul.f32 %v596, -0.8
        %v981 = vmul.f32 %v597, -0.8
        %v982 = vmul.f32 %v598, -0.8
        %v983 = vmul.f32 %v599, -0.8
        %v984 = vmul.f32 %v600, -0.8
        %v985 = vmul.f32 %v601, -0.8
        %v986 = vmul.f32 %v602, -0.8
        %v987 = vmul.f32 %v603, -0.8
        %v988 = vmul.f32 %v604, -0.8
        %v989 = vmul.f32 %v605, -0.8
        %v990 = vmul.f32 %v606, -0.8
        %v991 = vmul.f32 %v607, -0.8
        %v992 = vmul.f32 %v608, -0.8
        %v993 = vmul.f32 %v609, -0.8
        %v994 = vmul.f32 %v610, -0.8
        %v995 = vmul.f32 %v611, -0.8
        %v996 = vmul.f32 %v612, -0.8
        %v997 = vmul.f32 %v613, -0.8
        %v998 = vmul.f32 %v614, -0.8
        %v999 = vmul.f32 %v615, -0.8
        %v1000 = vmul.f32 %v616, -0.8
        %v1001 = vmul.f32 %v617, -0.8
        %v1002 = vmul.f32 %v618, -0.8
        %v1003 = vmul.f32 %v619, -0.8
        %v1004 = vmul.f32 %v620, -0.8
        %v1005 = vmul.f32 %v621, -0.8
        %v1006 = vmul.f32 %v622, -0.8
        %v1007 = vmul.f32 %v623, -0.8
        %v1008 = vmax.f32 %v976, 0.0
        %v1009 = vmax.f32 %v977, 0.0
        %v1010 = vmax.f32 %v978, 0.0
        %v1011 = vmax.f32 %v979, 0.0
        %v1012 = vmax.f32 %v980, 0.0
        %v1013 = vmax.f32 %v981, 0.0
        %v1014 = vmax.f32 %v982, 0.0
        %v1015 = vmax.f32 %v983, 0.0
        %v1016 = vmax.f32 %v984, 0.0
        %v1017 = vmax.f32 %v985, 0.0
        %v1018 = vmax.f32 %v986, 0.0
        %v1019 = vmax.f32 %v987, 0.0
        %v1020 = vmax.f32 %v988, 0.0
        %v1021 = vmax.f32 %v989, 0.0
        %v1022 = vmax.f32 %v990, 0.0
        %v1023 = vmax.f32 %v991, 0.0
        %v1024 = vmax.f32 %v992, 0.0
        %v1025 = vmax.f32 %v993, 0.0
        %v1026 = vmax.f32 %v994, 0.0
        %v1027 = vmax.f32 %v995, 0.0
        %v1028 = vmax.f32 %v996, 0.0
        %v1029 = vmax.f32 %v997, 0.0
        %v1030 = vmax.f32 %v998, 0.0
        %v1031 = vmax.f32 %v999, 0.0
        %v1032 = vmax.f32 %v1000, 0.0
        %v1033 = vmax.f32 %v1001, 0.0
        %v1034 = vmax.f32 %v1002, 0.0
        %v1035 = vmax.f32 %v1003, 0.0
        %v1036 = vmax.f32 %v1004, 0.0
        %v1037 = vmax.f32 %v1005, 0.0
        %v1038 = vmax.f32 %v1006, 0.0
        %v1039 = vmax.f32 %v1007, 0.0
        %v1040 = vsub.f32 %v592, %v1008
        %v1041 = vsub.f32 %v593, %v1009
        %v1042 = vsub.f32 %v594, %v1010
        %v1043 = vsub.f32 %v595, %v1011
        %v1044 = vsub.f32 %v596, %v1012
        %v1045 = vsub.f32 %v597, %v1013
        %v1046 = vsub.f32 %v598, %v1014
        %v1047 = vsub.f32 %v599, %v1015
        %v1048 = vsub.f32 %v600, %v1016
        %v1049 = vsub.f32 %v601, %v1017
        %v1050 = vsub.f32 %v602, %v1018
        %v1051 = vsub.f32 %v603, %v1019
        %v1052 = vsub.f32 %v604, %v1020
        %v1053 = vsub.f32 %v605, %v1021
        %v1054 = vsub.f32 %v606, %v1022
        %v1055 = vsub.f32 %v607, %v1023
        %v1056 = vsub.f32 %v608, %v1024
        %v1057 = vsub.f32 %v609, %v1025
        %v1058 = vsub.f32 %v610, %v1026
        %v1059 = vsub.f32 %v611, %v1027
        %v1060 = vsub.f32 %v612, %v1028
        %v1061 = vsub.f32 %v613, %v1029
        %v1062 = vsub.f32 %v614, %v1030
        %v1063 = vsub.f32 %v615, %v1031
        %v1064 = vsub.f32 %v616, %v1032
        %v1065 = vsub.f32 %v617, %v1033
        %v1066 = vsub.f32 %v618, %v1034
        %v1067 = vsub.f32 %v619, %v1035
        %v1068 = vsub.f32 %v620, %v1036
        %v1069 = vsub.f32 %v621, %v1037
        %v1070 = vsub.f32 %v622, %v1038
        %v1071 = vsub.f32 %v623, %v1039
        %v1072 = vmul.f32 %v1040, 0.8
        %v1073 = vmul.f32 %v1041, 0.8
        %v1074 = vmul.f32 %v1042, 0.8
        %v1075 = vmul.f32 %v1043, 0.8
        %v1076 = vmul.f32 %v1044, 0.8
        %v1077 = vmul.f32 %v1045, 0.8
        %v1078 = vmul.f32 %v1046, 0.8
        %v1079 = vmul.f32 %v1047, 0.8
        %v1080 = vmul.f32 %v1048, 0.8
        %v1081 = vmul.f32 %v1049, 0.8
        %v1082 = vmul.f32 %v1050, 0.8
        %v1083 = vmul.f32 %v1051, 0.8
        %v1084 = vmul.f32 %v1052, 0.8
        %v1085 = vmul.f32 %v1053, 0.8
        %v1086 = vmul.f32 %v1054, 0.8
        %v1087 = vmul.f32 %v1055, 0.8
        %v1088 = vmul.f32 %v1056, 0.8
        %v1089 = vmul.f32 %v1057, 0.8
        %v1090 = vmul.f32 %v1058, 0.8
        %v1091 = vmul.f32 %v1059, 0.8
        %v1092 = vmul.f32 %v1060, 0.8
        %v1093 = vmul.f32 %v1061, 0.8
        %v1094 = vmul.f32 %v1062, 0.8
        %v1095 = vmul.f32 %v1063, 0.8
        %v1096 = vmul.f32 %v1064, 0.8
        %v1097 = vmul.f32 %v1065, 0.8
        %v1098 = vmul.f32 %v1066, 0.8
        %v1099 = vmul.f32 %v1067, 0.8
        %v1100 = vmul.f32 %v1068, 0.8
        %v1101 = vmul.f32 %v1069, 0.8
        %v1102 = vmul.f32 %v1070, 0.8
        %v1103 = vmul.f32 %v1071, 0.8
        %v1104 = vmul.f32 %v1072, %v913
        %v1105 = vmul.f32 %v1073, %v915
        %v1106 = vmul.f32 %v1074, %v917
        %v1107 = vmul.f32 %v1075, %v919
        %v1108 = vmul.f32 %v1076, %v921
        %v1109 = vmul.f32 %v1077, %v923
        %v1110 = vmul.f32 %v1078, %v925
        %v1111 = vmul.f32 %v1079, %v927
        %v1112 = vmul.f32 %v1080, %v929
        %v1113 = vmul.f32 %v1081, %v931
        %v1114 = vmul.f32 %v1082, %v933
        %v1115 = vmul.f32 %v1083, %v935
        %v1116 = vmul.f32 %v1084, %v937
        %v1117 = vmul.f32 %v1085, %v939
        %v1118 = vmul.f32 %v1086, %v941
        %v1119 = vmul.f32 %v1087, %v943
        %v1120 = vmul.f32 %v1088, %v945
        %v1121 = vmul.f32 %v1089, %v947
        %v1122 = vmul.f32 %v1090, %v949
        %v1123 = vmul.f32 %v1091, %v951
        %v1124 = vmul.f32 %v1092, %v953
        %v1125 = vmul.f32 %v1093, %v955
        %v1126 = vmul.f32 %v1094, %v957
        %v1127 = vmul.f32 %v1095, %v959
        %v1128 = vmul.f32 %v1096, %v961
        %v1129 = vmul.f32 %v1097, %v963
        %v1130 = vmul.f32 %v1098, %v965
        %v1131 = vmul.f32 %v1099, %v967
        %v1132 = vmul.f32 %v1100, %v969
        %v1133 = vmul.f32 %v1101, %v971
        %v1134 = vmul.f32 %v1102, %v973
        %v1135 = vmul.f32 %v1103, %v975
        %v1136 = vadd.f32 %v720, %v752
        %v1137 = vadd.f32 %v721, %v753
        %v1138 = vadd.f32 %v722, %v754
        %v1139 = vadd.f32 %v723, %v755
        %v1140 = vadd.f32 %v724, %v756
        %v1141 = vadd.f32 %v725, %v757
        %v1142 = vadd.f32 %v726, %v758
        %v1143 = vadd.f32 %v727, %v759
        %v1144 = vadd.f32 %v728, %v760
        %v1145 = vadd.f32 %v729, %v761
        %v1146 = vadd.f32 %v730, %v762
        %v1147 = vadd.f32 %v731, %v763
        %v1148 = vadd.f32 %v732, %v764
        %v1149 = vadd.f32 %v733, %v765
        %v1150 = vadd.f32 %v734, %v766
        %v1151 = vadd.f32 %v735, %v767
        %v1152 = vadd.f32 %v736, %v768
        %v1153 = vadd.f32 %v737, %v769
        %v1154 = vadd.f32 %v738, %v770
        %v1155 = vadd.f32 %v739, %v771
        %v1156 = vadd.f32 %v740, %v772
        %v1157 = vadd.f32 %v741, %v773
        %v1158 = vadd.f32 %v742, %v774
        %v1159 = vadd.f32 %v743, %v775
        %v1160 = vadd.f32 %v744, %v776
        %v1161 = vadd.f32 %v745, %v777
        %v1162 = vadd.f32 %v746, %v778
        %v1163 = vadd.f32 %v747, %v779
        %v1164 = vadd.f32 %v748, %v780
        %v1165 = vadd.f32 %v749, %v781
        %v1166 = vadd.f32 %v750, %v782
        %v1167 = vadd.f32 %v751, %v783
        %v1168 = vadd.f32 %v1136, %v1104
        %v1169 = vadd.f32 %v1137, %v1105
        %v1170 = vadd.f32 %v1138, %v1106
        %v1171 = vadd.f32 %v1139, %v1107
        %v1172 = vadd.f32 %v1140, %v1108
        %v1173 = vadd.f32 %v1141, %v1109
        %v1174 = vadd.f32 %v1142, %v1110
        %v1175 = vadd.f32 %v1143, %v1111
        %v1176 = vadd.f32 %v1144, %v1112
        %v1177 = vadd.f32 %v1145, %v1113
        %v1178 = vadd.f32 %v1146, %v1114
        %v1179 = vadd.f32 %v1147, %v1115
        %v1180 = vadd.f32 %v1148, %v1116
        %v1181 = vadd.f32 %v1149, %v1117
        %v1182 = vadd.f32 %v1150, %v1118
        %v1183 = vadd.f32 %v1151, %v1119
        %v1184 = vadd.f32 %v1152, %v1120
        %v1185 = vadd.f32 %v1153, %v1121
        %v1186 = vadd.f32 %v1154, %v1122
        %v1187 = vadd.f32 %v1155, %v1123
        %v1188 = vadd.f32 %v1156, %v1124
        %v1189 = vadd.f32 %v1157, %v1125
        %v1190 = vadd.f32 %v1158, %v1126
        %v1191 = vadd.f32 %v1159, %v1127
        %v1192 = vadd.f32 %v1160, %v1128
        %v1193 = vadd.f32 %v1161, %v1129
        %v1194 = vadd.f32 %v1162, %v1130
        %v1195 = vadd.f32 %v1163, %v1131
        %v1196 = vadd.f32 %v1164, %v1132
        %v1197 = vadd.f32 %v1165, %v1133
        %v1198 = vadd.f32 %v1166, %v1134
        %v1199 = vadd.f32 %v1167, %v1135
        %1200 = vst [vmem:[%s191] sm:$0xff] %v1168
        %1201 = vst [vmem:[%s191 + $0x8] sm:$0xff] %v1169
        %1202 = vst [vmem:[%s191 + $0x10] sm:$0xff] %v1170
        %1203 = vst [vmem:[%s191 + $0x18] sm:$0xff] %v1171
        %1204 = vst [vmem:[%s191 + $0x20] sm:$0xff] %v1172
        %1205 = vst [vmem:[%s191 + $0x28] sm:$0xff] %v1173
        %1206 = vst [vmem:[%s191 + $0x30] sm:$0xff] %v1174
        %1207 = vst [vmem:[%s191 + $0x38] sm:$0xff] %v1175
        %1208 = vst [vmem:[%s191 + $0x40] sm:$0xff] %v1176
        %1209 = vst [vmem:[%s191 + $0x48] sm:$0xff] %v1177
        %1210 = vst [vmem:[%s191 + $0x50] sm:$0xff] %v1178
        %1211 = vst [vmem:[%s191 + $0x58] sm:$0xff] %v1179
        %1212 = vst [vmem:[%s191 + $0x60] sm:$0xff] %v1180
        %1213 = vst [vmem:[%s191 + $0x68] sm:$0xff] %v1181
        %1214 = vst [vmem:[%s191 + $0x70] sm:$0xff] %v1182
        %1215 = vst [vmem:[%s191 + $0x78] sm:$0xff] %v1183
        %1216 = vst [vmem:[%s191 + $0x80] sm:$0xff] %v1184
        %1217 = vst [vmem:[%s191 + $0x88] sm:$0xff] %v1185
        %1218 = vst [vmem:[%s191 + $0x90] sm:$0xff] %v1186
        %1219 = vst [vmem:[%s191 + $0x98] sm:$0xff] %v1187
        %1220 = vst [vmem:[%s191 + $0xa0] sm:$0xff] %v1188
        %1221 = vst [vmem:[%s191 + $0xa8] sm:$0xff] %v1189
        %1222 = vst [vmem:[%s191 + $0xb0] sm:$0xff] %v1190
        %1223 = vst [vmem:[%s191 + $0xb8] sm:$0xff] %v1191
        %1224 = vst [vmem:[%s191 + $0xc0] sm:$0xff] %v1192
        %1225 = vst [vmem:[%s191 + $0xc8] sm:$0xff] %v1193
        %1226 = vst [vmem:[%s191 + $0xd0] sm:$0xff] %v1194
        %1227 = vst [vmem:[%s191 + $0xd8] sm:$0xff] %v1195
        %1228 = vst [vmem:[%s191 + $0xe0] sm:$0xff] %v1196
        %1229 = vst [vmem:[%s191 + $0xe8] sm:$0xff] %v1197
        %1230 = vst [vmem:[%s191 + $0xf0] sm:$0xff] %v1198
        %1231 = vst [vmem:[%s191 + $0xf8] sm:$0xff] %v1199
        %s1232 = sand.u32 %s115, 1
        %s1233 = scalar_lea.sflag [#allocation3], %s1232
        %s1234 = sand.u32 %s115, 1
        %s1235 = smul.addr %s1234, 256
        %s1236 = scalar_lea.vmem [#allocation2], %s1235
        // Predicated region
        $region37: #{tpu_custom_call.1} parent=35 // pred_check
          %p1237 = pneg %p125
        $region38: #{tpu_custom_call.1} parent=35 // pred_check_branch
          %1239 = sbr.rel (%p1237) target = $region40
        $region39: #{tpu_custom_call.1} parent=35 // pred_region
          %s1240 = smul.u32 32, %s18
          %s1242 = ssub.s32 4096, 4096
          %1243 = vsyncadd %s1233, %s1242
          %s1244 = smul.addr %s1240, 128
          %s1245 = scalar_lea.hbm %s4, %s1244
          %s1246 = sshll.u32 %s1236, 4
          %s1247 = int_to_ptr.vmem [resolvable:$true] %s1246
          %1252 = dma.vmem_to_hbm [thread:$0]  %s1247, 4096, %s1245, %s1233, 128, 128, 8
        $region40: #{tpu_custom_call.1} parent=35 // pred_fallthru
          _
      $region36: #{tpu_custom_call.1} parent=5 // pred_fallthru
        _
      %p1253 = scmp.le.s32.totalorder 2, %s13
      // Predicated region
      $region41: #{tpu_custom_call.1} parent=5 // pred_check
        %p1254 = pneg %p1253
      $region42: #{tpu_custom_call.1} parent=5 // pred_check_branch
        %1256 = sbr.rel (%p1254) target = $region44
      $region43: #{tpu_custom_call.1} parent=5 // pred_region
        %s1257 = ssub.s32 %s13, 2
        // Predicated region
        $region45: #{tpu_custom_call.1} parent=43 // pred_check
          %p1258 = pneg %p131
        $region46: #{tpu_custom_call.1} parent=43 // pred_check_branch
          %1260 = sbr.rel (%p1258) target = $region48
        $region47: #{tpu_custom_call.1} parent=43 // pred_region
          %s1261 = sand.u32 %s116, 1
          %s1262 = scalar_lea.sflag [#allocation3], %s1261
          %s1263 = sand.u32 %s116, 1
          %s1264 = smul.addr %s1263, 256
          %s1265 = scalar_lea.vmem [#allocation2], %s1264
          %1266 = dma.done %s1262, 4096
        $region48: #{tpu_custom_call.1} parent=43 // pred_fallthru
          _
      $region44: #{tpu_custom_call.1} parent=5 // pred_fallthru
        _
    $region6: #{tpu_custom_call.1} parent=1 // loop_footer
      %s17 = sadd.s32 1, %s13
    $region7: #{tpu_custom_call.1} parent=1 // loop_footer_branch
      %12 = sbr.rel target = $region3
    $region8: #{tpu_custom_call.1} parent=1 // loop_exit
      _
    %1267 = vsyncpa [#allocation3], 1
    %s1268 = scalar_lea.sflag [#allocation3], 1
    %1269 = vsyncpa %s1268, 1

</llo_original>
